<compile_context>
chip_gen: v5e
topology: v5e:2x2
jax: 0.10.0
libtpu: 0.0.40
codegen_flags: <defaults>
</compile_context>

<pallas_src>
import functools

import jax
import jax.numpy as jnp
from jax.experimental import pallas as pl
from jax.experimental.pallas import tpu as pltpu


def _round_up(x, m):
    return (x + m - 1) // m * m


def _apply_activation(y, activation):
    # NOTE: padded feature columns stay exactly 0 only because
    # activation(0) == 0 for relu / tanh / elu.  Do not add sigmoid/softplus
    # here without also masking the padded columns.
    if activation == "tanh":
        return jnp.tanh(y)
    if activation == "elu":
        # ELU alpha=1.0; clamp expm1 arg so a future autodiff path cannot
        # produce NaN grads from the masked branch.
        return jnp.where(y > 0, y, jnp.expm1(jnp.minimum(y, 0.0)))
    return jnp.maximum(y, 0.0)  # relu: PyTorch FCStack default branch


def _fused_fc_kernel(*refs, num_layers, activation):
    """One batch tile through the whole FC stack, all layers fused in VMEM.

    refs = (x_ref, w0_ref, b0_ref, ..., w{L-1}_ref, b{L-1}_ref, o_ref)
      x tile : (TILE_M, in_pad)  f32   (streamed / double-buffered per grid step)
      w_i    : (in_pad_i, out_pad_i) bf16  (VMEM-resident across the grid)
      b_i    : (1, out_pad_i)    f32
    Matmuls go through the MXU in bf16 with f32 accumulation; bias add and
    the activation stay in f32.
    """
    x_ref = refs[0]
    o_ref = refs[-1]

    x = x_ref[...].astype(jnp.float32)
    for i in range(num_layers):
        w = refs[1 + 2 * i][...]          # bf16 (in_pad, out_pad)
        b = refs[2 + 2 * i][...]          # f32  (1, out_pad) -> row broadcast
        y = jnp.dot(x.astype(jnp.bfloat16), w,
                    preferred_element_type=jnp.float32) + b
        if i < num_layers - 1:            # hidden layers get the activation
            y = _apply_activation(y, activation)
        x = y
    o_ref[...] = x.astype(o_ref.dtype)


class FCStackPallas:
    """JAX/Pallas port of the PyTorch FCStack module (fused, gridded forward)."""

    def __init__(self, input_dim, num_units, activation, output_dim, key,
                 tile_m=256):
        self._activation = activation
        self._input_dim = input_dim
        self._output_dim = output_dim
        self._tile_m = tile_m

        dims = [input_dim] + list(num_units) + [output_dim]
        self.params = []          # unpadded f32 (W_t (in,out), b (out,)) reference
        self._padded_params = []  # padded (W_t bf16 (in_pad,out_pad), b f32 (1,out_pad))
        for i in range(len(dims) - 1):
            din, dout = dims[i], dims[i + 1]
            key, kw, kb = jax.random.split(key, 3)
            # Match PyTorch nn.Linear default init: U(-1/sqrt(in), 1/sqrt(in))
            bound = 1.0 / (din ** 0.5)
            w = jax.random.uniform(kw, (dout, din), jnp.float32, -bound, bound)
            b = jax.random.uniform(kb, (dout,), jnp.float32, -bound, bound)
            w_t = w.T
            self.params.append((w_t, b))

            din_p, dout_p = _round_up(din, 128), _round_up(dout, 128)
            w_pad = jnp.zeros((din_p, dout_p), jnp.float32)
            w_pad = w_pad.at[:din, :dout].set(w_t).astype(jnp.bfloat16)
            b_pad = jnp.zeros((1, dout_p), jnp.float32).at[0, :dout].set(b)
            self._padded_params.append((w_pad, b_pad))

        self._num_layers = len(self._padded_params)
        self._in_pad = _round_up(input_dim, 128)
        self._out_pad = self._padded_params[-1][0].shape[1]
        self._max_feat_pad = max(
            [self._in_pad] + [w.shape[1] for w, _ in self._padded_params])

    def _vmem_limit_bytes(self, tile_m):
        # Resident weights/biases (count 2x to be safe about buffering) plus
        # double-buffered x/out tiles and f32 intermediate vregs, with margin.
        weight_bytes = sum(
            w.size * w.dtype.itemsize + b.size * 4
            for w, b in self._padded_params)
        act_bytes = 2 * tile_m * self._in_pad * 4
        out_bytes = 2 * tile_m * self._out_pad * 4
        interm_bytes = 2 * tile_m * self._max_feat_pad * 4
        needed = 2 * weight_bytes + act_bytes + out_bytes + interm_bytes
        # Floor at 32 MiB (scoped default on v6e/v7x), cap at 64 MiB so the
        # same request is valid on v7x's smaller physical VMEM.
        return int(min(max(needed + (8 << 20), 32 << 20), 64 << 20))

    def __call__(self, x):
        batch = x.shape[0]

        # Batch tile: >=256 rows when the batch allows (keeps the MXU
        # pipelined); otherwise a single 8-aligned tile.
        tile_m = self._tile_m
        if batch < tile_m:
            tile_m = _round_up(batch, 8)
        batch_pad = _round_up(batch, tile_m)
        grid = (batch_pad // tile_m,)

        # Single fused pad (rows -> tile_m multiple, lanes -> 128 multiple).
        x_pad = jnp.pad(
            x.astype(jnp.float32),
            ((0, batch_pad - batch), (0, self._in_pad - self._input_dim)))

        flat_args = [x_pad]
        in_specs = [pl.BlockSpec((tile_m, self._in_pad), lambda i: (i, 0))]
        flops = 0
        transcendentals = 0
        bytes_accessed = x_pad.size * 4 + batch_pad * self._out_pad * 4
        for li, (w_pad, b_pad) in enumerate(self._padded_params):
            flat_args.extend([w_pad, b_pad])
            # Constant index_map -> weights/biases stay VMEM-resident across
            # all batch tiles (fetched once, reused by every grid step).
            in_specs.append(pl.BlockSpec(w_pad.shape, lambda i: (0, 0)))
            in_specs.append(pl.BlockSpec(b_pad.shape, lambda i: (0, 0)))
            flops += 2 * batch_pad * w_pad.shape[0] * w_pad.shape[1]
            bytes_accessed += w_pad.size * 2 + b_pad.size * 4
            if li < self._num_layers - 1 and self._activation in ("tanh", "elu"):
                transcendentals += batch_pad * w_pad.shape[1]

        kernel = functools.partial(
            _fused_fc_kernel,
            num_layers=self._num_layers,
            activation=self._activation,
        )

        out_pad = pl.pallas_call(
            kernel,
            out_shape=jax.ShapeDtypeStruct((batch_pad, self._out_pad),
                                           jnp.float32),
            grid=grid,
            in_specs=in_specs,
            out_specs=pl.BlockSpec((tile_m, self._out_pad), lambda i: (i, 0)),
            compiler_params=pltpu.CompilerParams(
                dimension_semantics=("parallel",),
                vmem_limit_bytes=self._vmem_limit_bytes(tile_m),
            ),
            cost_estimate=pl.CostEstimate(
                flops=flops,
                transcendentals=transcendentals,
                bytes_accessed=bytes_accessed,
            ),
        )(*flat_args)

        # Slice away padding in the wrapper (kernel store stays lane-dense).
        return out_pad[:batch, : self._output_dim]


def _reference(x, params, activation, emulate_bf16):
    """Pure-JAX reference (unpadded). emulate_bf16 mirrors the kernel's
    bf16 matmul inputs with f32 accumulation."""
    x = x.astype(jnp.float32)
    n = len(params)
    for li, (w_t, b) in enumerate(params):
        if emulate_bf16:
            xm = x.astype(jnp.bfloat16).astype(jnp.float32)
            wm = w_t.astype(jnp.bfloat16).astype(jnp.float32)
        else:
            xm, wm = x, w_t
        y = xm @ wm + b
        if li < n - 1:
            y = _apply_activation(y, activation)
        x = y
    return x


if __name__ == "__main__":
    key = jax.random.PRNGKey(0)
    key, kx = jax.random.split(key)

    batch = 300            # pads to 512 -> 2 batch tiles of 256 (exercises grid)
    input_dim = 32
    num_units = (64, 48)
    output_dim = 16
    activation = "tanh"

    x = jax.random.normal(kx, (batch, input_dim), dtype=jnp.float32)

    model = FCStackPallas(input_dim, num_units, activation, output_dim, key)
    out = jax.block_until_ready(model(x))

    assert out.shape == (batch, output_dim)

    # Tight check against a reference that emulates the kernel's bf16 matmul
    # inputs, plus a loose check against the pure-f32 PyTorch-style reference.
    ref_bf16 = _reference(x, model.params, activation, emulate_bf16=True)
    ref_f32 = _reference(x, model.params, activation, emulate_bf16=False)
    assert jnp.allclose(out, ref_bf16, atol=5e-3, rtol=5e-3)
    assert jnp.allclose(out, ref_f32, atol=5e-2, rtol=5e-2)

    print("KERNEL_OK")
</pallas_src>

<mosaic_0001>
module attributes {stable_mosaic.version = 11 : i64} {
  func.func @_fused_fc_kernel(%arg0: i32, %arg1: memref<256x128xf32, #tpu.memory_space<vmem>>, %arg2: memref<128x128xbf16, #tpu.memory_space<vmem>>, %arg3: memref<1x128xf32, #tpu.memory_space<vmem>>, %arg4: memref<128x128xbf16, #tpu.memory_space<vmem>>, %arg5: memref<1x128xf32, #tpu.memory_space<vmem>>, %arg6: memref<128x128xbf16, #tpu.memory_space<vmem>>, %arg7: memref<1x128xf32, #tpu.memory_space<vmem>>, %arg8: memref<256x128xf32, #tpu.memory_space<vmem>>) attributes {dimension_semantics = [#tpu.dimension_semantics<parallel>], iteration_bounds = array<i64: 2>, scalar_prefetch = 0 : i64, scratch_operands = 0 : i64, tpu.core_type = #tpu.core_type<tc>, window_params = [{transform_indices = @transform_0, window_bounds = array<i64: 256, 128>}, {pipeline_mode = #tpu.pipeline_mode<synchronous>, transform_indices = @transform_1, window_bounds = array<i64: 128, 128>}, {pipeline_mode = #tpu.pipeline_mode<synchronous>, transform_indices = @transform_2, window_bounds = array<i64: 1, 128>}, {pipeline_mode = #tpu.pipeline_mode<synchronous>, transform_indices = @transform_3, window_bounds = array<i64: 128, 128>}, {pipeline_mode = #tpu.pipeline_mode<synchronous>, transform_indices = @transform_4, window_bounds = array<i64: 1, 128>}, {pipeline_mode = #tpu.pipeline_mode<synchronous>, transform_indices = @transform_5, window_bounds = array<i64: 128, 128>}, {pipeline_mode = #tpu.pipeline_mode<synchronous>, transform_indices = @transform_6, window_bounds = array<i64: 1, 128>}, {transform_indices = @transform_7, window_bounds = array<i64: 256, 128>}]} {
    %c0 = arith.constant 0 : index
    %c0_0 = arith.constant 0 : index
    %0 = vector.load %arg1[%c0, %c0_0] : memref<256x128xf32, #tpu.memory_space<vmem>>, vector<256x128xf32>
    %c0_1 = arith.constant 0 : index
    %c0_2 = arith.constant 0 : index
    %1 = vector.load %arg2[%c0_1, %c0_2] : memref<128x128xbf16, #tpu.memory_space<vmem>>, vector<128x128xbf16>
    %c0_3 = arith.constant 0 : index
    %c0_4 = arith.constant 0 : index
    %2 = vector.load %arg3[%c0_3, %c0_4] : memref<1x128xf32, #tpu.memory_space<vmem>>, vector<1x128xf32>
    %3 = arith.truncf %0 : vector<256x128xf32> to vector<256x128xbf16>
    %cst = arith.constant dense<0.000000e+00> : vector<256x128xf32>
    %4 = tpu.matmul %3, %1, %cst {dimension_numbers = #tpu.dot_dimension_numbers<[1], [0], [0], [1], [0, 0, 1, 1], [], []>} : vector<256x128xbf16>, vector<128x128xbf16>, vector<256x128xf32> -> vector<256x128xf32>
    %5 = vector.broadcast %2 : vector<1x128xf32> to vector<256x128xf32>
    %6 = arith.addf %4, %5 : vector<256x128xf32>
    %7 = math.tanh %6 : vector<256x128xf32>
    %c0_5 = arith.constant 0 : index
    %c0_6 = arith.constant 0 : index
    %8 = vector.load %arg4[%c0_5, %c0_6] : memref<128x128xbf16, #tpu.memory_space<vmem>>, vector<128x128xbf16>
    %c0_7 = arith.constant 0 : index
    %c0_8 = arith.constant 0 : index
    %9 = vector.load %arg5[%c0_7, %c0_8] : memref<1x128xf32, #tpu.memory_space<vmem>>, vector<1x128xf32>
    %10 = arith.truncf %7 : vector<256x128xf32> to vector<256x128xbf16>
    %cst_9 = arith.constant dense<0.000000e+00> : vector<256x128xf32>
    %11 = tpu.matmul %10, %8, %cst_9 {dimension_numbers = #tpu.dot_dimension_numbers<[1], [0], [0], [1], [0, 0, 1, 1], [], []>} : vector<256x128xbf16>, vector<128x128xbf16>, vector<256x128xf32> -> vector<256x128xf32>
    %12 = vector.broadcast %9 : vector<1x128xf32> to vector<256x128xf32>
    %13 = arith.addf %11, %12 : vector<256x128xf32>
    %14 = math.tanh %13 : vector<256x128xf32>
    %c0_10 = arith.constant 0 : index
    %c0_11 = arith.constant 0 : index
    %15 = vector.load %arg6[%c0_10, %c0_11] : memref<128x128xbf16, #tpu.memory_space<vmem>>, vector<128x128xbf16>
    %c0_12 = arith.constant 0 : index
    %c0_13 = arith.constant 0 : index
    %16 = vector.load %arg7[%c0_12, %c0_13] : memref<1x128xf32, #tpu.memory_space<vmem>>, vector<1x128xf32>
    %17 = arith.truncf %14 : vector<256x128xf32> to vector<256x128xbf16>
    %cst_14 = arith.constant dense<0.000000e+00> : vector<256x128xf32>
    %18 = tpu.matmul %17, %15, %cst_14 {dimension_numbers = #tpu.dot_dimension_numbers<[1], [0], [0], [1], [0, 0, 1, 1], [], []>} : vector<256x128xbf16>, vector<128x128xbf16>, vector<256x128xf32> -> vector<256x128xf32>
    %19 = vector.broadcast %16 : vector<1x128xf32> to vector<256x128xf32>
    %20 = arith.addf %18, %19 : vector<256x128xf32>
    %c0_15 = arith.constant 0 : index
    %c0_16 = arith.constant 0 : index
    %21 = vector.load %arg8[%c0_15, %c0_16] : memref<256x128xf32, #tpu.memory_space<vmem>>, vector<256x128xf32>
    tpu.vector_store %arg8[%c0_15, %c0_16], %20 {strides = array<i32>} : memref<256x128xf32, #tpu.memory_space<vmem>>, vector<256x128xf32>,
    return
  }
  func.func @transform_0(%arg0: i32) -> (i32, i32) {
    %c0_i32 = arith.constant 0 : i32
    %c0_i32_0 = arith.constant 0 : i32
    return %arg0, %c0_i32 : i32, i32
  }
  func.func @transform_1(%arg0: i32) -> (i32, i32) {
    %c0_i32 = arith.constant 0 : i32
    %c0_i32_0 = arith.constant 0 : i32
    %c0_i32_1 = arith.constant 0 : i32
    return %c0_i32, %c0_i32_0 : i32, i32
  }
  func.func @transform_2(%arg0: i32) -> (i32, i32) {
    %c0_i32 = arith.constant 0 : i32
    %c0_i32_0 = arith.constant 0 : i32
    %c0_i32_1 = arith.constant 0 : i32
    return %c0_i32, %c0_i32_0 : i32, i32
  }
  func.func @transform_3(%arg0: i32) -> (i32, i32) {
    %c0_i32 = arith.constant 0 : i32
    %c0_i32_0 = arith.constant 0 : i32
    %c0_i32_1 = arith.constant 0 : i32
    return %c0_i32, %c0_i32_0 : i32, i32
  }
  func.func @transform_4(%arg0: i32) -> (i32, i32) {
    %c0_i32 = arith.constant 0 : i32
    %c0_i32_0 = arith.constant 0 : i32
    %c0_i32_1 = arith.constant 0 : i32
    return %c0_i32, %c0_i32_0 : i32, i32
  }
  func.func @transform_5(%arg0: i32) -> (i32, i32) {
    %c0_i32 = arith.constant 0 : i32
    %c0_i32_0 = arith.constant 0 : i32
    %c0_i32_1 = arith.constant 0 : i32
    return %c0_i32, %c0_i32_0 : i32, i32
  }
  func.func @transform_6(%arg0: i32) -> (i32, i32) {
    %c0_i32 = arith.constant 0 : i32
    %c0_i32_0 = arith.constant 0 : i32
    %c0_i32_1 = arith.constant 0 : i32
    return %c0_i32, %c0_i32_0 : i32, i32
  }
  func.func @transform_7(%arg0: i32) -> (i32, i32) {
    %c0_i32 = arith.constant 0 : i32
    %c0_i32_0 = arith.constant 0 : i32
    return %arg0, %c0_i32 : i32, i32
  }
}

</mosaic_0001>

<llo_original>
// kernel: tpu_custom_call.1
$region0: #{tpu_custom_call.1}
  #allocation0 [shape = 'u32[]', space=smem, size = 0x4, offset = 0x4, fixed_abs, tag = 'smem constant byte address 0x4 - core index']
  #allocation1 [shape = 'u32[72,128]{1,0:T(1,128)}', space=vmem, size = 0x9000, scoped, tag = 'internal scratch']
  %s0 = inlined_call_operand.hbm [shape: f32[512,128], index: 0, kind: input, shape index: {}]
  %s1 = inlined_call_operand.hbm [shape: bf16[128,128], index: 1, kind: input, shape index: {}]
  %s2 = inlined_call_operand.vmem [shape: f32[1,128], index: 2, kind: input, shape index: {}]
  %s3 = inlined_call_operand.hbm [shape: bf16[128,128], index: 3, kind: input, shape index: {}]
  %s4 = inlined_call_operand.vmem [shape: f32[1,128], index: 4, kind: input, shape index: {}]
  %s5 = inlined_call_operand.hbm [shape: bf16[128,128], index: 5, kind: input, shape index: {}]
  %s6 = inlined_call_operand.vmem [shape: f32[1,128], index: 6, kind: input, shape index: {}]
  %s7 = inlined_call_operand.hbm [shape: f32[512,128], index: 7, kind: output, shape index: {}]
  %s8 = sld [smem:[#allocation0]]
  $region77: #{tpu_custom_call.1} parent=0
    _
  %s10 = ssub.s32 1, %s8
  %s11 = scalar_select 0, %s10, %s8
  $region1: #{tpu_custom_call.1} parent=0
    #allocation2 [shape = 'u8[262144]{0}', space=vmem, size = 0x40000, scoped, tag = 'input window, operand 0']
    #allocation3 [shape = 's32[2]{0}', space=sflag, size = 0x8, scoped, tag = 'scoped memory for tpu_custom_call.1']
    #allocation4 [shape = 's32[2]{0}', space=sflag, size = 0x8, scoped, tag = 'scoped memory for tpu_custom_call.1']
    #allocation5 [shape = 'u8[32768]{0}', space=vmem, size = 0x8000, scoped, tag = 'input window, operand 1, single buffered']
    #allocation6 [shape = 's32[1]{0}', space=sflag, size = 0x4, scoped, tag = 'scoped memory for tpu_custom_call.1']
    #allocation7 [shape = 'u8[32768]{0}', space=vmem, size = 0x8000, scoped, tag = 'input window, operand 3, single buffered']
    #allocation8 [shape = 'u8[32768]{0}', space=vmem, size = 0x8000, scoped, tag = 'input window, operand 5, single buffered']
    #allocation9 [shape = 's32[1]{0}', space=sflag, size = 0x4, scoped, tag = 'scoped memory for tpu_custom_call.1']
    #allocation10 [shape = 'u8[262144]{0}', space=vmem, size = 0x40000, scoped, tag = 'output window, operand 0']
    %12 = vsyncpa [#allocation3], 0
    %s13 = scalar_lea.sflag [#allocation3], 1
    %14 = vsyncpa %s13, 0
    %15 = vsyncpa [#allocation6], 0
    %16 = vsyncpa [#allocation9], 0
    %17 = vsyncpa [#allocation4], 0
    %s18 = scalar_lea.sflag [#allocation4], 1
    %19 = vsyncpa %s18, 0
    loop: start=0, step=1, limit=4
    $region2: #{tpu_custom_call.1} parent=1 // loop_pre_header
      _
    $region3: #{tpu_custom_call.1} parent=1 // loop_header
      %s21 = sphi 0, %s25
      %p22 = scmp.ge.s32.totalorder %s21, 4
      %s31 = sphi 0, %s33
      %s34 = sphi 0, %s31
      %s35 = sphi 0, %s34
      %s51 = sphi 0, %s35
      %s55 = sphi 0, %s55
      %s57 = sphi 0, %s55
      %s58 = sphi 0, %s57
      %s72 = sphi 0, %s58
      %s76 = sphi 0, %s76
      %s78 = sphi 0, %s76
      %s79 = sphi 0, %s78
      %s93 = sphi 0, %s79
      %s97 = sphi 0, %s97
      %s99 = sphi 0, %s97
      %s100 = sphi 0, %s99
      %s114 = sphi 0, %s100
      %s118 = sphi 0, %s118
      %s120 = sphi 0, %s118
      %s121 = sphi 0, %s120
      %s135 = sphi 0, %s121
      %s139 = sphi 0, %s139
      %s141 = sphi 0, %s139
      %s142 = sphi 0, %s141
      %s156 = sphi 0, %s142
      %s160 = sphi 0, %s160
      %s162 = sphi 0, %s160
      %s163 = sphi 0, %s162
      %s177 = sphi 0, %s163
      %s183 = sphi 0, %s185
      %s186 = sphi 0, %s183
      %s187 = sphi 0, %s186
      %s203 = sphi 0, %s187
    $region4: #{tpu_custom_call.1} parent=1 // loop_header_branch
      %24 = sbr.rel (%p22) target = $region8
    $region5: #{tpu_custom_call.1} parent=1 // loop_body
      %s26 = ssub.s32 %s21, 1
      %s27 = ssub.s32 %s21, 2
      %s28 = sadd.s32 %s21, 1
      %s29 = ssub.s32 %s21, %s28
      %p30 = scmp.eq.s32.totalorder %s29, 0
      %s32 = sadd.s32 %s31, 1
      %s33 = scalar_select %p30, %s31, %s32
      %p36 = pneg %p30
      %p37 = scmp.eq.s32.totalorder %s21, 1
      %p38 = por %p36, %p37
      %p39 = scmp.ne.s32.totalorder %s31, %s34
      %p40 = scmp.eq.s32.totalorder %s21, 0
      %p41 = por %p39, %p40
      %p42 = scmp.ne.s32.totalorder %s31, %s34
      %p43 = scmp.eq.s32.totalorder %s26, 1
      %p44 = por %p42, %p43
      %p45 = scmp.ne.s32.totalorder %s34, %s35
      %p46 = scmp.eq.s32.totalorder %s26, 0
      %p47 = por %p45, %p46
      %p48 = scmp.ne.s32.totalorder %s34, %s35
      %p49 = scmp.eq.s32.totalorder %s27, 1
      %p50 = por %p48, %p49
      %p52 = scmp.ne.s32.totalorder %s35, %s51
      %p53 = scmp.eq.s32.totalorder %s27, 0
      %p54 = por %p52, %p53
      %s56 = sadd.s32 %s55, 1
      %p59 = scmp.eq.s32.totalorder %s21, 1
      %p60 = scmp.ne.s32.totalorder %s55, %s57
      %p61 = scmp.eq.s32.totalorder %s21, 0
      %p62 = por %p60, %p61
      %p63 = scmp.ne.s32.totalorder %s55, %s57
      %p64 = scmp.eq.s32.totalorder %s26, 1
      %p65 = por %p63, %p64
      %p66 = scmp.ne.s32.totalorder %s57, %s58
      %p67 = scmp.eq.s32.totalorder %s26, 0
      %p68 = por %p66, %p67
      %p69 = scmp.ne.s32.totalorder %s57, %s58
      %p70 = scmp.eq.s32.totalorder %s27, 1
      %p71 = por %p69, %p70
      %p73 = scmp.ne.s32.totalorder %s58, %s72
      %p74 = scmp.eq.s32.totalorder %s27, 0
      %p75 = por %p73, %p74
      %s77 = sadd.s32 %s76, 1
      %p80 = scmp.eq.s32.totalorder %s21, 1
      %p81 = scmp.ne.s32.totalorder %s76, %s78
      %p82 = scmp.eq.s32.totalorder %s21, 0
      %p83 = por %p81, %p82
      %p84 = scmp.ne.s32.totalorder %s76, %s78
      %p85 = scmp.eq.s32.totalorder %s26, 1
      %p86 = por %p84, %p85
      %p87 = scmp.ne.s32.totalorder %s78, %s79
      %p88 = scmp.eq.s32.totalorder %s26, 0
      %p89 = por %p87, %p88
      %p90 = scmp.ne.s32.totalorder %s78, %s79
      %p91 = scmp.eq.s32.totalorder %s27, 1
      %p92 = por %p90, %p91
      %p94 = scmp.ne.s32.totalorder %s79, %s93
      %p95 = scmp.eq.s32.totalorder %s27, 0
      %p96 = por %p94, %p95
      %s98 = sadd.s32 %s97, 1
      %p101 = scmp.eq.s32.totalorder %s21, 1
      %p102 = scmp.ne.s32.totalorder %s97, %s99
      %p103 = scmp.eq.s32.totalorder %s21, 0
      %p104 = por %p102, %p103
      %p105 = scmp.ne.s32.totalorder %s97, %s99
      %p106 = scmp.eq.s32.totalorder %s26, 1
      %p107 = por %p105, %p106
      %p108 = scmp.ne.s32.totalorder %s99, %s100
      %p109 = scmp.eq.s32.totalorder %s26, 0
      %p110 = por %p108, %p109
      %p111 = scmp.ne.s32.totalorder %s99, %s100
      %p112 = scmp.eq.s32.totalorder %s27, 1
      %p113 = por %p111, %p112
      %p115 = scmp.ne.s32.totalorder %s100, %s114
      %p116 = scmp.eq.s32.totalorder %s27, 0
      %p117 = por %p115, %p116
      %s119 = sadd.s32 %s118, 1
      %p122 = scmp.eq.s32.totalorder %s21, 1
      %p123 = scmp.ne.s32.totalorder %s118, %s120
      %p124 = scmp.eq.s32.totalorder %s21, 0
      %p125 = por %p123, %p124
      %p126 = scmp.ne.s32.totalorder %s118, %s120
      %p127 = scmp.eq.s32.totalorder %s26, 1
      %p128 = por %p126, %p127
      %p129 = scmp.ne.s32.totalorder %s120, %s121
      %p130 = scmp.eq.s32.totalorder %s26, 0
      %p131 = por %p129, %p130
      %p132 = scmp.ne.s32.totalorder %s120, %s121
      %p133 = scmp.eq.s32.totalorder %s27, 1
      %p134 = por %p132, %p133
      %p136 = scmp.ne.s32.totalorder %s121, %s135
      %p137 = scmp.eq.s32.totalorder %s27, 0
      %p138 = por %p136, %p137
      %s140 = sadd.s32 %s139, 1
      %p143 = scmp.eq.s32.totalorder %s21, 1
      %p144 = scmp.ne.s32.totalorder %s139, %s141
      %p145 = scmp.eq.s32.totalorder %s21, 0
      %p146 = por %p144, %p145
      %p147 = scmp.ne.s32.totalorder %s139, %s141
      %p148 = scmp.eq.s32.totalorder %s26, 1
      %p149 = por %p147, %p148
      %p150 = scmp.ne.s32.totalorder %s141, %s142
      %p151 = scmp.eq.s32.totalorder %s26, 0
      %p152 = por %p150, %p151
      %p153 = scmp.ne.s32.totalorder %s141, %s142
      %p154 = scmp.eq.s32.totalorder %s27, 1
      %p155 = por %p153, %p154
      %p157 = scmp.ne.s32.totalorder %s142, %s156
      %p158 = scmp.eq.s32.totalorder %s27, 0
      %p159 = por %p157, %p158
      %s161 = sadd.s32 %s160, 1
      %p164 = scmp.eq.s32.totalorder %s21, 1
      %p165 = scmp.ne.s32.totalorder %s160, %s162
      %p166 = scmp.eq.s32.totalorder %s21, 0
      %p167 = por %p165, %p166
      %p168 = scmp.ne.s32.totalorder %s160, %s162
      %p169 = scmp.eq.s32.totalorder %s26, 1
      %p170 = por %p168, %p169
      %p171 = scmp.ne.s32.totalorder %s162, %s163
      %p172 = scmp.eq.s32.totalorder %s26, 0
      %p173 = por %p171, %p172
      %p174 = scmp.ne.s32.totalorder %s162, %s163
      %p175 = scmp.eq.s32.totalorder %s27, 1
      %p176 = por %p174, %p175
      %p178 = scmp.ne.s32.totalorder %s163, %s177
      %p179 = scmp.eq.s32.totalorder %s27, 0
      %p180 = por %p178, %p179
      %s181 = ssub.s32 %s21, %s28
      %p182 = scmp.eq.s32.totalorder %s181, 0
      %s184 = sadd.s32 %s183, 1
      %s185 = scalar_select %p182, %s183, %s184
      %p188 = pneg %p182
      %p189 = scmp.eq.s32.totalorder %s21, 1
      %p190 = por %p188, %p189
      %p191 = scmp.ne.s32.totalorder %s183, %s186
      %p192 = scmp.eq.s32.totalorder %s21, 0
      %p193 = por %p191, %p192
      %p194 = scmp.ne.s32.totalorder %s183, %s186
      %p195 = scmp.eq.s32.totalorder %s26, 1
      %p196 = por %p194, %p195
      %p197 = scmp.ne.s32.totalorder %s186, %s187
      %p198 = scmp.eq.s32.totalorder %s26, 0
      %p199 = por %p197, %p198
      %p200 = scmp.ne.s32.totalorder %s186, %s187
      %p201 = scmp.eq.s32.totalorder %s27, 1
      %p202 = por %p200, %p201
      %p204 = scmp.ne.s32.totalorder %s187, %s203
      %p205 = scmp.eq.s32.totalorder %s27, 0
      %p206 = por %p204, %p205
      %p207 = scmp.le.s32.totalorder 1, %s21
      %p208 = scmp.lt.s32.totalorder %s21, 3
      %p209 = pnand %p207, %p208
      %p210 = pneg %p209
      // Predicated region
      $region9: #{tpu_custom_call.1} parent=5 // pred_check
        _
      $region10: #{tpu_custom_call.1} parent=5 // pred_check_branch
        %212 = sbr.rel (%p209) target = $region12
      $region11: #{tpu_custom_call.1} parent=5 // pred_region
        %s213 = ssub.s32 %s21, 1
        // Predicated region
        $region13: #{tpu_custom_call.1} parent=11 // pred_check
          %p214 = pneg %p68
        $region14: #{tpu_custom_call.1} parent=11 // pred_check_branch
          %216 = sbr.rel (%p214) target = $region16
        $region15: #{tpu_custom_call.1} parent=11 // pred_region
          %218 = vsyncadd [#allocation6], 0
          %s219 = sshll.u32 %s1, 4
          %s220 = int_to_ptr.hbm [resolvable:$true] %s219
          %s221 = sshll.u32 [#allocation5], 4
          %s222 = int_to_ptr.vmem [resolvable:$true] %s221
          %227 = dma.hbm_to_vmem [thread:$0]  %s220, 1024, %s222, [#allocation6], 64, 64, 4
        $region16: #{tpu_custom_call.1} parent=11 // pred_fallthru
          _
        // Predicated region
        $region17: #{tpu_custom_call.1} parent=11 // pred_check
          %p228 = pneg %p89
        $region18: #{tpu_custom_call.1} parent=11 // pred_check_branch
          %230 = sbr.rel (%p228) target = $region20
        $region19: #{tpu_custom_call.1} parent=11 // pred_region
          _
        $region20: #{tpu_custom_call.1} parent=11 // pred_fallthru
          _
        // Predicated region
        $region21: #{tpu_custom_call.1} parent=11 // pred_check
          %p231 = pneg %p110
        $region22: #{tpu_custom_call.1} parent=11 // pred_check_branch
          %233 = sbr.rel (%p231) target = $region24
        $region23: #{tpu_custom_call.1} parent=11 // pred_region
          %235 = vsyncadd [#allocation6], 0
          %s236 = sshll.u32 %s3, 4
          %s237 = int_to_ptr.hbm [resolvable:$true] %s236
          %s238 = sshll.u32 [#allocation7], 4
          %s239 = int_to_ptr.vmem [resolvable:$true] %s238
          %244 = dma.hbm_to_vmem [thread:$0]  %s237, 1024, %s239, [#allocation6], 64, 64, 4
        $region24: #{tpu_custom_call.1} parent=11 // pred_fallthru
          _
        // Predicated region
        $region25: #{tpu_custom_call.1} parent=11 // pred_check
          %p245 = pneg %p131
        $region26: #{tpu_custom_call.1} parent=11 // pred_check_branch
          %247 = sbr.rel (%p245) target = $region28
        $region27: #{tpu_custom_call.1} parent=11 // pred_region
          _
        $region28: #{tpu_custom_call.1} parent=11 // pred_fallthru
          _
        // Predicated region
        $region29: #{tpu_custom_call.1} parent=11 // pred_check
          %p248 = pneg %p152
        $region30: #{tpu_custom_call.1} parent=11 // pred_check_branch
          %250 = sbr.rel (%p248) target = $region32
        $region31: #{tpu_custom_call.1} parent=11 // pred_region
          %252 = vsyncadd [#allocation9], 0
          %s253 = sshll.u32 %s5, 4
          %s254 = int_to_ptr.hbm [resolvable:$true] %s253
          %s255 = sshll.u32 [#allocation8], 4
          %s256 = int_to_ptr.vmem [resolvable:$true] %s255
          %261 = dma.hbm_to_vmem [thread:$0]  %s254, 1024, %s256, [#allocation9], 64, 64, 4
        $region32: #{tpu_custom_call.1} parent=11 // pred_fallthru
          _
        // Predicated region
        $region33: #{tpu_custom_call.1} parent=11 // pred_check
          %p262 = pneg %p173
        $region34: #{tpu_custom_call.1} parent=11 // pred_check_branch
          %264 = sbr.rel (%p262) target = $region36
        $region35: #{tpu_custom_call.1} parent=11 // pred_region
          _
        $region36: #{tpu_custom_call.1} parent=11 // pred_fallthru
          _
      $region12: #{tpu_custom_call.1} parent=5 // pred_fallthru
        _
      %p265 = scmp.lt.s32.totalorder %s21, 2
      // Predicated region
      $region37: #{tpu_custom_call.1} parent=5 // pred_check
        %p266 = pneg %p265
      $region38: #{tpu_custom_call.1} parent=5 // pred_check_branch
        %268 = sbr.rel (%p266) target = $region40
      $region39: #{tpu_custom_call.1} parent=5 // pred_region
        // Predicated region
        $region41: #{tpu_custom_call.1} parent=39 // pred_check
          %p269 = pneg %p41
        $region42: #{tpu_custom_call.1} parent=39 // pred_check_branch
          %271 = sbr.rel (%p269) target = $region44
        $region43: #{tpu_custom_call.1} parent=39 // pred_region
          %s272 = sand.u32 %s31, 1
          %s273 = scalar_lea.sflag [#allocation3], %s272
          %s274 = sand.u32 %s31, 1
          %s275 = smul.addr %s274, 256
          %s276 = scalar_lea.vmem [#allocation2], %s275
          %s277 = smul.u32 32, %s21
          %279 = vsyncadd %s273, 0
          %s280 = smul.addr %s277, 8
          %s281 = scalar_lea.hbm %s0, %s280
          %s282 = sshll.u32 %s281, 4
          %s283 = int_to_ptr.hbm [resolvable:$true] %s282
          %s284 = sshll.u32 %s276, 4
          %s285 = int_to_ptr.vmem [resolvable:$true] %s284
          %290 = dma.hbm_to_vmem [thread:$0]  %s283, 4096, %s285, %s273, 128, 128, 8
        $region44: #{tpu_custom_call.1} parent=39 // pred_fallthru
          _
      $region40: #{tpu_custom_call.1} parent=5 // pred_fallthru
        _
      %p291 = scmp.le.s32.totalorder 1, %s21
      %p292 = scmp.lt.s32.totalorder %s21, 3
      %p293 = pnand %p291, %p292
      %p294 = pneg %p293
      // Predicated region
      $region45: #{tpu_custom_call.1} parent=5 // pred_check
        _
      $region46: #{tpu_custom_call.1} parent=5 // pred_check_branch
        %296 = sbr.rel (%p293) target = $region48
      $region47: #{tpu_custom_call.1} parent=5 // pred_region
        %s297 = ssub.s32 %s21, 1
        %s298 = sand.u32 %s34, 1
        %s299 = scalar_lea.sflag [#allocation3], %s298
        %s300 = sand.u32 %s34, 1
        %s301 = smul.addr %s300, 256
        %s302 = scalar_lea.vmem [#allocation2], %s301
        // Predicated region
        $region49: #{tpu_custom_call.1} parent=47 // pred_check
          %p303 = pneg %p47
        $region50: #{tpu_custom_call.1} parent=47 // pred_check_branch
          %305 = sbr.rel (%p303) target = $region52
        $region51: #{tpu_custom_call.1} parent=47 // pred_region
          %307 = dma.done %s299, 4096
        $region52: #{tpu_custom_call.1} parent=47 // pred_fallthru
          _
        // Predicated region
        $region53: #{tpu_custom_call.1} parent=47 // pred_check
          %p308 = pneg %p68
        $region54: #{tpu_custom_call.1} parent=47 // pred_check_branch
          %310 = sbr.rel (%p308) target = $region56
        $region55: #{tpu_custom_call.1} parent=47 // pred_region
          %312 = dma.done [#allocation6], 1024
        $region56: #{tpu_custom_call.1} parent=47 // pred_fallthru
          _
        // Predicated region
        $region57: #{tpu_custom_call.1} parent=47 // pred_check
          %p313 = pneg %p110
        $region58: #{tpu_custom_call.1} parent=47 // pred_check_branch
          %315 = sbr.rel (%p313) target = $region60
        $region59: #{tpu_custom_call.1} parent=47 // pred_region
          %317 = dma.done [#allocation6], 1024
        $region60: #{tpu_custom_call.1} parent=47 // pred_fallthru
          _
        // Predicated region
        $region61: #{tpu_custom_call.1} parent=47 // pred_check
          %p318 = pneg %p152
        $region62: #{tpu_custom_call.1} parent=47 // pred_check_branch
          %320 = sbr.rel (%p318) target = $region64
        $region63: #{tpu_custom_call.1} parent=47 // pred_region
          %322 = dma.done [#allocation9], 1024
        $region64: #{tpu_custom_call.1} parent=47 // pred_fallthru
          _
        %s323 = sand.u32 %s34, 1
        %s324 = scalar_lea.sflag [#allocation3], %s323
        %s325 = sand.u32 %s34, 1
        %s326 = smul.addr %s325, 256
        %s327 = scalar_lea.vmem [#allocation2], %s326
        %p328 = pneg %p47
        %p329 = pneg %p44
        %p330 = pneg %p68
        %p331 = pneg %p65
        %p332 = pneg %p89
        %p333 = pneg %p86
        %p334 = pneg %p110
        %p335 = pneg %p107
        %p336 = pneg %p131
        %p337 = pneg %p128
        %p338 = pneg %p152
        %p339 = pneg %p149
        %p340 = pneg %p173
        %p341 = pneg %p170
        %p342 = pneg %p199
        %p343 = pneg %p196
        %s344 = sand.u32 %s186, 1
        %s345 = scalar_lea.sflag [#allocation4], %s344
        %s346 = sand.u32 %s186, 1
        %s347 = smul.addr %s346, 256
        %s348 = scalar_lea.vmem [#allocation10], %s347
        %s349 = smul.u32 32, %s26
        %s350 = smul.u32 32, %s26
        %v351 = vld [vmem:[%s302] sm:$0xff]
        %v352 = vld [vmem:[%s302 + $0x8] sm:$0xff]
        %v353 = vld [vmem:[%s302 + $0x10] sm:$0xff]
        %v354 = vld [vmem:[%s302 + $0x18] sm:$0xff]
        %v355 = vld [vmem:[%s302 + $0x20] sm:$0xff]
        %v356 = vld [vmem:[%s302 + $0x28] sm:$0xff]
        %v357 = vld [vmem:[%s302 + $0x30] sm:$0xff]
        %v358 = vld [vmem:[%s302 + $0x38] sm:$0xff]
        %v359 = vld [vmem:[%s302 + $0x40] sm:$0xff]
        %v360 = vld [vmem:[%s302 + $0x48] sm:$0xff]
        %v361 = vld [vmem:[%s302 + $0x50] sm:$0xff]
        %v362 = vld [vmem:[%s302 + $0x58] sm:$0xff]
        %v363 = vld [vmem:[%s302 + $0x60] sm:$0xff]
        %v364 = vld [vmem:[%s302 + $0x68] sm:$0xff]
        %v365 = vld [vmem:[%s302 + $0x70] sm:$0xff]
        %v366 = vld [vmem:[%s302 + $0x78] sm:$0xff]
        %v367 = vld [vmem:[%s302 + $0x80] sm:$0xff]
        %v368 = vld [vmem:[%s302 + $0x88] sm:$0xff]
        %v369 = vld [vmem:[%s302 + $0x90] sm:$0xff]
        %v370 = vld [vmem:[%s302 + $0x98] sm:$0xff]
        %v371 = vld [vmem:[%s302 + $0xa0] sm:$0xff]
        %v372 = vld [vmem:[%s302 + $0xa8] sm:$0xff]
        %v373 = vld [vmem:[%s302 + $0xb0] sm:$0xff]
        %v374 = vld [vmem:[%s302 + $0xb8] sm:$0xff]
        %v375 = vld [vmem:[%s302 + $0xc0] sm:$0xff]
        %v376 = vld [vmem:[%s302 + $0xc8] sm:$0xff]
        %v377 = vld [vmem:[%s302 + $0xd0] sm:$0xff]
        %v378 = vld [vmem:[%s302 + $0xd8] sm:$0xff]
        %v379 = vld [vmem:[%s302 + $0xe0] sm:$0xff]
        %v380 = vld [vmem:[%s302 + $0xe8] sm:$0xff]
        %v381 = vld [vmem:[%s302 + $0xf0] sm:$0xff]
        %v382 = vld [vmem:[%s302 + $0xf8] sm:$0xff]
        %v383 = vld [vmem:[#allocation5] sm:$0xf]
        %v384 = vld [vmem:[#allocation5 + $0x4] sm:$0xf]
        %v385 = vld [vmem:[#allocation5 + $0x8] sm:$0xf]
        %v386 = vld [vmem:[#allocation5 + $0xc] sm:$0xf]
        %v387 = vld [vmem:[#allocation5 + $0x10] sm:$0xf]
        %v388 = vld [vmem:[#allocation5 + $0x14] sm:$0xf]
        %v389 = vld [vmem:[#allocation5 + $0x18] sm:$0xf]
        %v390 = vld [vmem:[#allocation5 + $0x1c] sm:$0xf]
        %v391 = vld [vmem:[#allocation5 + $0x20] sm:$0xf]
        %v392 = vld [vmem:[#allocation5 + $0x24] sm:$0xf]
        %v393 = vld [vmem:[#allocation5 + $0x28] sm:$0xf]
        %v394 = vld [vmem:[#allocation5 + $0x2c] sm:$0xf]
        %v395 = vld [vmem:[#allocation5 + $0x30] sm:$0xf]
        %v396 = vld [vmem:[#allocation5 + $0x34] sm:$0xf]
        %v397 = vld [vmem:[#allocation5 + $0x38] sm:$0xf]
        %v398 = vld [vmem:[#allocation5 + $0x3c] sm:$0xf]
        %v399 = vld [vmem:[%s2] sm:$0x1]
        %v400 = vpack.c.bf16 %v352, %v351
        %v401 = vpack.c.bf16 %v354, %v353
        %v402 = vpack.c.bf16 %v356, %v355
        %v403 = vpack.c.bf16 %v358, %v357
        %v404 = vpack.c.bf16 %v360, %v359
        %v405 = vpack.c.bf16 %v362, %v361
        %v406 = vpack.c.bf16 %v364, %v363
        %v407 = vpack.c.bf16 %v366, %v365
        %v408 = vpack.c.bf16 %v368, %v367
        %v409 = vpack.c.bf16 %v370, %v369
        %v410 = vpack.c.bf16 %v372, %v371
        %v411 = vpack.c.bf16 %v374, %v373
        %v412 = vpack.c.bf16 %v376, %v375
        %v413 = vpack.c.bf16 %v378, %v377
        %v414 = vpack.c.bf16 %v380, %v379
        %v415 = vpack.c.bf16 %v382, %v381
        %v417 = vperm.slane %v399, 0
        %v435 = vunpack.c.l.b16 %v383
        %v436 = vunpack.c.l.b16 %v384
        %v437 = vunpack.c.l.b16 %v385
        %v438 = vunpack.c.l.b16 %v386
        %v439 = vunpack.c.l.b16 %v387
        %v440 = vunpack.c.l.b16 %v388
        %v441 = vunpack.c.l.b16 %v389
        %v442 = vunpack.c.l.b16 %v390
        %v443 = vunpack.c.l.b16 %v391
        %v444 = vunpack.c.l.b16 %v392
        %v445 = vunpack.c.l.b16 %v393
        %v446 = vunpack.c.l.b16 %v394
        %v447 = vunpack.c.l.b16 %v395
        %v448 = vunpack.c.l.b16 %v396
        %v449 = vunpack.c.l.b16 %v397
        %v450 = vunpack.c.l.b16 %v398
        %v451 = vpack.c.b16 %v436, %v435
        %v452 = vpack.c.b16 %v438, %v437
        %v453 = vpack.c.b16 %v440, %v439
        %v454 = vpack.c.b16 %v442, %v441
        %v455 = vpack.c.b16 %v444, %v443
        %v456 = vpack.c.b16 %v446, %v445
        %v457 = vpack.c.b16 %v448, %v447
        %v458 = vpack.c.b16 %v450, %v449
        %467 = vmatpush.bf16.msra.mxu0 %v458
        %468 = vmatpush.bf16.msra.mxu0 %v457
        %469 = vmatpush.bf16.msra.mxu0 %v456
        %470 = vmatpush.bf16.msra.mxu0 %v455
        %471 = vmatpush.bf16.msra.mxu0 %v454
        %472 = vmatpush.bf16.msra.mxu0 %v453
        %473 = vmatpush.bf16.msra.mxu0 %v452
        %474 = vmatpush.bf16.msra.mxu0 %v451
        %475 = vmatmul.bf16.gmra.mxu0 %v400
        %v476 = vpop.f32.mrf.mxu0
        %v477 = vadd.f32 %v417, %v476
        %v478 = vpop.f32.mrf.mxu0
        %v479 = vadd.f32 %v417, %v478
        %480 = vmatmul.bf16.gmra.mxu0 %v401
        %v481 = vpop.f32.mrf.mxu0
        %v482 = vadd.f32 %v417, %v481
        %v483 = vpop.f32.mrf.mxu0
        %v484 = vadd.f32 %v417, %v483
        %485 = vmatmul.bf16.gmra.mxu0 %v402
        %v486 = vpop.f32.mrf.mxu0
        %v487 = vadd.f32 %v417, %v486
        %v488 = vpop.f32.mrf.mxu0
        %v489 = vadd.f32 %v417, %v488
        %490 = vmatmul.bf16.gmra.mxu0 %v403
        %v491 = vpop.f32.mrf.mxu0
        %v492 = vadd.f32 %v417, %v491
        %v493 = vpop.f32.mrf.mxu0
        %v494 = vadd.f32 %v417, %v493
        %495 = vmatmul.bf16.gmra.mxu0 %v404
        %v496 = vpop.f32.mrf.mxu0
        %v497 = vadd.f32 %v417, %v496
        %v498 = vpop.f32.mrf.mxu0
        %v499 = vadd.f32 %v417, %v498
        %500 = vmatmul.bf16.gmra.mxu0 %v405
        %v501 = vpop.f32.mrf.mxu0
        %v502 = vadd.f32 %v417, %v501
        %v503 = vpop.f32.mrf.mxu0
        %v504 = vadd.f32 %v417, %v503
        %505 = vmatmul.bf16.gmra.mxu0 %v406
        %v506 = vpop.f32.mrf.mxu0
        %v507 = vadd.f32 %v417, %v506
        %v508 = vpop.f32.mrf.mxu0
        %v509 = vadd.f32 %v417, %v508
        %510 = vmatmul.bf16.gmra.mxu0 %v407
        %v511 = vpop.f32.mrf.mxu0
        %v512 = vadd.f32 %v417, %v511
        %v513 = vpop.f32.mrf.mxu0
        %v514 = vadd.f32 %v417, %v513
        %515 = vmatmul.bf16.gmra.mxu0 %v408
        %v516 = vpop.f32.mrf.mxu0
        %v517 = vadd.f32 %v417, %v516
        %v518 = vpop.f32.mrf.mxu0
        %v519 = vadd.f32 %v417, %v518
        %520 = vmatmul.bf16.gmra.mxu0 %v409
        %v521 = vpop.f32.mrf.mxu0
        %v522 = vadd.f32 %v417, %v521
        %v523 = vpop.f32.mrf.mxu0
        %v524 = vadd.f32 %v417, %v523
        %525 = vmatmul.bf16.gmra.mxu0 %v410
        %v526 = vpop.f32.mrf.mxu0
        %v527 = vadd.f32 %v417, %v526
        %v528 = vpop.f32.mrf.mxu0
        %v529 = vadd.f32 %v417, %v528
        %530 = vmatmul.bf16.gmra.mxu0 %v411
        %v531 = vpop.f32.mrf.mxu0
        %v532 = vadd.f32 %v417, %v531
        %v533 = vpop.f32.mrf.mxu0
        %v534 = vadd.f32 %v417, %v533
        %535 = vmatmul.bf16.gmra.mxu0 %v412
        %v536 = vpop.f32.mrf.mxu0
        %v537 = vadd.f32 %v417, %v536
        %v538 = vpop.f32.mrf.mxu0
        %v539 = vadd.f32 %v417, %v538
        %540 = vmatmul.bf16.gmra.mxu0 %v413
        %v541 = vpop.f32.mrf.mxu0
        %v542 = vadd.f32 %v417, %v541
        %v543 = vpop.f32.mrf.mxu0
        %v544 = vadd.f32 %v417, %v543
        %545 = vmatmul.bf16.gmra.mxu0 %v414
        %v546 = vpop.f32.mrf.mxu0
        %v547 = vadd.f32 %v417, %v546
        %v548 = vpop.f32.mrf.mxu0
        %v549 = vadd.f32 %v417, %v548
        %550 = vmatmul.bf16.gmra.mxu0 %v415
        %v551 = vpop.f32.mrf.mxu0
        %v552 = vadd.f32 %v417, %v551
        %v553 = vpop.f32.mrf.mxu0
        %v554 = vadd.f32 %v417, %v553
        %555 = vdwg.mxu0
        %v556 = vtanh.pop %v477
        %v557 = vtanh.pop %v479
        %v558 = vtanh.pop %v482
        %v559 = vtanh.pop %v484
        %v560 = vtanh.pop %v487
        %v561 = vtanh.pop %v489
        %v562 = vtanh.pop %v492
        %v563 = vtanh.pop %v494
        %v564 = vtanh.pop %v497
        %v565 = vtanh.pop %v499
        %v566 = vtanh.pop %v502
        %v567 = vtanh.pop %v504
        %v568 = vtanh.pop %v507
        %v569 = vtanh.pop %v509
        %v570 = vtanh.pop %v512
        %v571 = vtanh.pop %v514
        %v572 = vtanh.pop %v517
        %v573 = vtanh.pop %v519
        %v574 = vtanh.pop %v522
        %v575 = vtanh.pop %v524
        %v576 = vtanh.pop %v527
        %v577 = vtanh.pop %v529
        %v578 = vtanh.pop %v532
        %v579 = vtanh.pop %v534
        %v580 = vtanh.pop %v537
        %v581 = vtanh.pop %v539
        %v582 = vtanh.pop %v542
        %v583 = vtanh.pop %v544
        %v584 = vtanh.pop %v547
        %v585 = vtanh.pop %v549
        %v586 = vtanh.pop %v552
        %v587 = vtanh.pop %v554
        %v588 = vld [vmem:[#allocation7] sm:$0xf]
        %v589 = vld [vmem:[#allocation7 + $0x4] sm:$0xf]
        %v590 = vld [vmem:[#allocation7 + $0x8] sm:$0xf]
        %v591 = vld [vmem:[#allocation7 + $0xc] sm:$0xf]
        %v592 = vld [vmem:[#allocation7 + $0x10] sm:$0xf]
        %v593 = vld [vmem:[#allocation7 + $0x14] sm:$0xf]
        %v594 = vld [vmem:[#allocation7 + $0x18] sm:$0xf]
        %v595 = vld [vmem:[#allocation7 + $0x1c] sm:$0xf]
        %v596 = vld [vmem:[#allocation7 + $0x20] sm:$0xf]
        %v597 = vld [vmem:[#allocation7 + $0x24] sm:$0xf]
        %v598 = vld [vmem:[#allocation7 + $0x28] sm:$0xf]
        %v599 = vld [vmem:[#allocation7 + $0x2c] sm:$0xf]
        %v600 = vld [vmem:[#allocation7 + $0x30] sm:$0xf]
        %v601 = vld [vmem:[#allocation7 + $0x34] sm:$0xf]
        %v602 = vld [vmem:[#allocation7 + $0x38] sm:$0xf]
        %v603 = vld [vmem:[#allocation7 + $0x3c] sm:$0xf]
        %v604 = vld [vmem:[%s4] sm:$0x1]
        %v605 = vpack.c.bf16 %v557, %v556
        %v606 = vpack.c.bf16 %v559, %v558
        %v607 = vpack.c.bf16 %v561, %v560
        %v608 = vpack.c.bf16 %v563, %v562
        %v609 = vpack.c.bf16 %v565, %v564
        %v610 = vpack.c.bf16 %v567, %v566
        %v611 = vpack.c.bf16 %v569, %v568
        %v612 = vpack.c.bf16 %v571, %v570
        %v613 = vpack.c.bf16 %v573, %v572
        %v614 = vpack.c.bf16 %v575, %v574
        %v615 = vpack.c.bf16 %v577, %v576
        %v616 = vpack.c.bf16 %v579, %v578
        %v617 = vpack.c.bf16 %v581, %v580
        %v618 = vpack.c.bf16 %v583, %v582
        %v619 = vpack.c.bf16 %v585, %v584
        %v620 = vpack.c.bf16 %v587, %v586
        %v622 = vperm.slane %v604, 0
        %v640 = vunpack.c.l.b16 %v588
        %v641 = vunpack.c.l.b16 %v589
        %v642 = vunpack.c.l.b16 %v590
        %v643 = vunpack.c.l.b16 %v591
        %v644 = vunpack.c.l.b16 %v592
        %v645 = vunpack.c.l.b16 %v593
        %v646 = vunpack.c.l.b16 %v594
        %v647 = vunpack.c.l.b16 %v595
        %v648 = vunpack.c.l.b16 %v596
        %v649 = vunpack.c.l.b16 %v597
        %v650 = vunpack.c.l.b16 %v598
        %v651 = vunpack.c.l.b16 %v599
        %v652 = vunpack.c.l.b16 %v600
        %v653 = vunpack.c.l.b16 %v601
        %v654 = vunpack.c.l.b16 %v602
        %v655 = vunpack.c.l.b16 %v603
        %v656 = vpack.c.b16 %v641, %v640
        %v657 = vpack.c.b16 %v643, %v642
        %v658 = vpack.c.b16 %v645, %v644
        %v659 = vpack.c.b16 %v647, %v646
        %v660 = vpack.c.b16 %v649, %v648
        %v661 = vpack.c.b16 %v651, %v650
        %v662 = vpack.c.b16 %v653, %v652
        %v663 = vpack.c.b16 %v655, %v654
        %672 = vmatpush.bf16.msra.mxu0 %v663
        %673 = vmatpush.bf16.msra.mxu0 %v662
        %674 = vmatpush.bf16.msra.mxu0 %v661
        %675 = vmatpush.bf16.msra.mxu0 %v660
        %676 = vmatpush.bf16.msra.mxu0 %v659
        %677 = vmatpush.bf16.msra.mxu0 %v658
        %678 = vmatpush.bf16.msra.mxu0 %v657
        %679 = vmatpush.bf16.msra.mxu0 %v656
        %680 = vmatmul.bf16.gmra.mxu0 %v605
        %v681 = vpop.f32.mrf.mxu0
        %v682 = vadd.f32 %v622, %v681
        %v683 = vpop.f32.mrf.mxu0
        %v684 = vadd.f32 %v622, %v683
        %685 = vmatmul.bf16.gmra.mxu0 %v606
        %v686 = vpop.f32.mrf.mxu0
        %v687 = vadd.f32 %v622, %v686
        %v688 = vpop.f32.mrf.mxu0
        %v689 = vadd.f32 %v622, %v688
        %690 = vmatmul.bf16.gmra.mxu0 %v607
        %v691 = vpop.f32.mrf.mxu0
        %v692 = vadd.f32 %v622, %v691
        %v693 = vpop.f32.mrf.mxu0
        %v694 = vadd.f32 %v622, %v693
        %695 = vmatmul.bf16.gmra.mxu0 %v608
        %v696 = vpop.f32.mrf.mxu0
        %v697 = vadd.f32 %v622, %v696
        %v698 = vpop.f32.mrf.mxu0
        %v699 = vadd.f32 %v622, %v698
        %700 = vmatmul.bf16.gmra.mxu0 %v609
        %v701 = vpop.f32.mrf.mxu0
        %v702 = vadd.f32 %v622, %v701
        %v703 = vpop.f32.mrf.mxu0
        %v704 = vadd.f32 %v622, %v703
        %705 = vmatmul.bf16.gmra.mxu0 %v610
        %v706 = vpop.f32.mrf.mxu0
        %v707 = vadd.f32 %v622, %v706
        %v708 = vpop.f32.mrf.mxu0
        %v709 = vadd.f32 %v622, %v708
        %710 = vmatmul.bf16.gmra.mxu0 %v611
        %v711 = vpop.f32.mrf.mxu0
        %v712 = vadd.f32 %v622, %v711
        %v713 = vpop.f32.mrf.mxu0
        %v714 = vadd.f32 %v622, %v713
        %715 = vmatmul.bf16.gmra.mxu0 %v612
        %v716 = vpop.f32.mrf.mxu0
        %v717 = vadd.f32 %v622, %v716
        %v718 = vpop.f32.mrf.mxu0
        %v719 = vadd.f32 %v622, %v718
        %720 = vmatmul.bf16.gmra.mxu0 %v613
        %v721 = vpop.f32.mrf.mxu0
        %v722 = vadd.f32 %v622, %v721
        %v723 = vpop.f32.mrf.mxu0
        %v724 = vadd.f32 %v622, %v723
        %725 = vmatmul.bf16.gmra.mxu0 %v614
        %v726 = vpop.f32.mrf.mxu0
        %v727 = vadd.f32 %v622, %v726
        %v728 = vpop.f32.mrf.mxu0
        %v729 = vadd.f32 %v622, %v728
        %730 = vmatmul.bf16.gmra.mxu0 %v615
        %v731 = vpop.f32.mrf.mxu0
        %v732 = vadd.f32 %v622, %v731
        %v733 = vpop.f32.mrf.mxu0
        %v734 = vadd.f32 %v622, %v733
        %735 = vmatmul.bf16.gmra.mxu0 %v616
        %v736 = vpop.f32.mrf.mxu0
        %v737 = vadd.f32 %v622, %v736
        %v738 = vpop.f32.mrf.mxu0
        %v739 = vadd.f32 %v622, %v738
        %740 = vmatmul.bf16.gmra.mxu0 %v617
        %v741 = vpop.f32.mrf.mxu0
        %v742 = vadd.f32 %v622, %v741
        %v743 = vpop.f32.mrf.mxu0
        %v744 = vadd.f32 %v622, %v743
        %745 = vmatmul.bf16.gmra.mxu0 %v618
        %v746 = vpop.f32.mrf.mxu0
        %v747 = vadd.f32 %v622, %v746
        %v748 = vpop.f32.mrf.mxu0
        %v749 = vadd.f32 %v622, %v748
        %750 = vmatmul.bf16.gmra.mxu0 %v619
        %v751 = vpop.f32.mrf.mxu0
        %v752 = vadd.f32 %v622, %v751
        %v753 = vpop.f32.mrf.mxu0
        %v754 = vadd.f32 %v622, %v753
        %755 = vmatmul.bf16.gmra.mxu0 %v620
        %v756 = vpop.f32.mrf.mxu0
        %v757 = vadd.f32 %v622, %v756
        %v758 = vpop.f32.mrf.mxu0
        %v759 = vadd.f32 %v622, %v758
        %760 = vdwg.mxu0
        %v761 = vtanh.pop %v682
        %v762 = vtanh.pop %v684
        %v763 = vtanh.pop %v687
        %v764 = vtanh.pop %v689
        %v765 = vtanh.pop %v692
        %v766 = vtanh.pop %v694
        %v767 = vtanh.pop %v697
        %v768 = vtanh.pop %v699
        %v769 = vtanh.pop %v702
        %v770 = vtanh.pop %v704
        %v771 = vtanh.pop %v707
        %v772 = vtanh.pop %v709
        %v773 = vtanh.pop %v712
        %v774 = vtanh.pop %v714
        %v775 = vtanh.pop %v717
        %v776 = vtanh.pop %v719
        %v777 = vtanh.pop %v722
        %v778 = vtanh.pop %v724
        %v779 = vtanh.pop %v727
        %v780 = vtanh.pop %v729
        %v781 = vtanh.pop %v732
        %v782 = vtanh.pop %v734
        %v783 = vtanh.pop %v737
        %v784 = vtanh.pop %v739
        %v785 = vtanh.pop %v742
        %v786 = vtanh.pop %v744
        %v787 = vtanh.pop %v747
        %v788 = vtanh.pop %v749
        %v789 = vtanh.pop %v752
        %v790 = vtanh.pop %v754
        %v791 = vtanh.pop %v757
        %v792 = vtanh.pop %v759
        %v793 = vld [vmem:[#allocation8] sm:$0xf]
        %v794 = vld [vmem:[#allocation8 + $0x4] sm:$0xf]
        %v795 = vld [vmem:[#allocation8 + $0x8] sm:$0xf]
        %v796 = vld [vmem:[#allocation8 + $0xc] sm:$0xf]
        %v797 = vld [vmem:[#allocation8 + $0x10] sm:$0xf]
        %v798 = vld [vmem:[#allocation8 + $0x14] sm:$0xf]
        %v799 = vld [vmem:[#allocation8 + $0x18] sm:$0xf]
        %v800 = vld [vmem:[#allocation8 + $0x1c] sm:$0xf]
        %v801 = vld [vmem:[#allocation8 + $0x20] sm:$0xf]
        %v802 = vld [vmem:[#allocation8 + $0x24] sm:$0xf]
        %v803 = vld [vmem:[#allocation8 + $0x28] sm:$0xf]
        %v804 = vld [vmem:[#allocation8 + $0x2c] sm:$0xf]
        %v805 = vld [vmem:[#allocation8 + $0x30] sm:$0xf]
        %v806 = vld [vmem:[#allocation8 + $0x34] sm:$0xf]
        %v807 = vld [vmem:[#allocation8 + $0x38] sm:$0xf]
        %v808 = vld [vmem:[#allocation8 + $0x3c] sm:$0xf]
        %v809 = vld [vmem:[%s6] sm:$0x1]
        %v810 = vpack.c.bf16 %v762, %v761
        %v811 = vpack.c.bf16 %v764, %v763
        %v812 = vpack.c.bf16 %v766, %v765
        %v813 = vpack.c.bf16 %v768, %v767
        %v814 = vpack.c.bf16 %v770, %v769
        %v815 = vpack.c.bf16 %v772, %v771
        %v816 = vpack.c.bf16 %v774, %v773
        %v817 = vpack.c.bf16 %v776, %v775
        %v818 = vpack.c.bf16 %v778, %v777
        %v819 = vpack.c.bf16 %v780, %v779
        %v820 = vpack.c.bf16 %v782, %v781
        %v821 = vpack.c.bf16 %v784, %v783
        %v822 = vpack.c.bf16 %v786, %v785
        %v823 = vpack.c.bf16 %v788, %v787
        %v824 = vpack.c.bf16 %v790, %v789
        %v825 = vpack.c.bf16 %v792, %v791
        %v827 = vperm.slane %v809, 0
        %v845 = vunpack.c.l.b16 %v793
        %v846 = vunpack.c.l.b16 %v794
        %v847 = vunpack.c.l.b16 %v795
        %v848 = vunpack.c.l.b16 %v796
        %v849 = vunpack.c.l.b16 %v797
        %v850 = vunpack.c.l.b16 %v798
        %v851 = vunpack.c.l.b16 %v799
        %v852 = vunpack.c.l.b16 %v800
        %v853 = vunpack.c.l.b16 %v801
        %v854 = vunpack.c.l.b16 %v802
        %v855 = vunpack.c.l.b16 %v803
        %v856 = vunpack.c.l.b16 %v804
        %v857 = vunpack.c.l.b16 %v805
        %v858 = vunpack.c.l.b16 %v806
        %v859 = vunpack.c.l.b16 %v807
        %v860 = vunpack.c.l.b16 %v808
        %v861 = vpack.c.b16 %v846, %v845
        %v862 = vpack.c.b16 %v848, %v847
        %v863 = vpack.c.b16 %v850, %v849
        %v864 = vpack.c.b16 %v852, %v851
        %v865 = vpack.c.b16 %v854, %v853
        %v866 = vpack.c.b16 %v856, %v855
        %v867 = vpack.c.b16 %v858, %v857
        %v868 = vpack.c.b16 %v860, %v859
        %877 = vmatpush.bf16.msra.mxu0 %v868
        %878 = vmatpush.bf16.msra.mxu0 %v867
        %879 = vmatpush.bf16.msra.mxu0 %v866
        %880 = vmatpush.bf16.msra.mxu0 %v865
        %881 = vmatpush.bf16.msra.mxu0 %v864
        %882 = vmatpush.bf16.msra.mxu0 %v863
        %883 = vmatpush.bf16.msra.mxu0 %v862
        %884 = vmatpush.bf16.msra.mxu0 %v861
        %885 = vmatmul.bf16.gmra.mxu0 %v810
        %v886 = vpop.f32.mrf.mxu0
        %v887 = vadd.f32 %v827, %v886
        %v888 = vpop.f32.mrf.mxu0
        %v889 = vadd.f32 %v827, %v888
        %890 = vmatmul.bf16.gmra.mxu0 %v811
        %v891 = vpop.f32.mrf.mxu0
        %v892 = vadd.f32 %v827, %v891
        %v893 = vpop.f32.mrf.mxu0
        %v894 = vadd.f32 %v827, %v893
        %895 = vmatmul.bf16.gmra.mxu0 %v812
        %v896 = vpop.f32.mrf.mxu0
        %v897 = vadd.f32 %v827, %v896
        %v898 = vpop.f32.mrf.mxu0
        %v899 = vadd.f32 %v827, %v898
        %900 = vmatmul.bf16.gmra.mxu0 %v813
        %v901 = vpop.f32.mrf.mxu0
        %v902 = vadd.f32 %v827, %v901
        %v903 = vpop.f32.mrf.mxu0
        %v904 = vadd.f32 %v827, %v903
        %905 = vmatmul.bf16.gmra.mxu0 %v814
        %v906 = vpop.f32.mrf.mxu0
        %v907 = vadd.f32 %v827, %v906
        %v908 = vpop.f32.mrf.mxu0
        %v909 = vadd.f32 %v827, %v908
        %910 = vmatmul.bf16.gmra.mxu0 %v815
        %v911 = vpop.f32.mrf.mxu0
        %v912 = vadd.f32 %v827, %v911
        %v913 = vpop.f32.mrf.mxu0
        %v914 = vadd.f32 %v827, %v913
        %915 = vmatmul.bf16.gmra.mxu0 %v816
        %v916 = vpop.f32.mrf.mxu0
        %v917 = vadd.f32 %v827, %v916
        %v918 = vpop.f32.mrf.mxu0
        %v919 = vadd.f32 %v827, %v918
        %920 = vmatmul.bf16.gmra.mxu0 %v817
        %v921 = vpop.f32.mrf.mxu0
        %v922 = vadd.f32 %v827, %v921
        %v923 = vpop.f32.mrf.mxu0
        %v924 = vadd.f32 %v827, %v923
        %925 = vmatmul.bf16.gmra.mxu0 %v818
        %v926 = vpop.f32.mrf.mxu0
        %v927 = vadd.f32 %v827, %v926
        %v928 = vpop.f32.mrf.mxu0
        %v929 = vadd.f32 %v827, %v928
        %930 = vmatmul.bf16.gmra.mxu0 %v819
        %v931 = vpop.f32.mrf.mxu0
        %v932 = vadd.f32 %v827, %v931
        %v933 = vpop.f32.mrf.mxu0
        %v934 = vadd.f32 %v827, %v933
        %935 = vmatmul.bf16.gmra.mxu0 %v820
        %v936 = vpop.f32.mrf.mxu0
        %v937 = vadd.f32 %v827, %v936
        %v938 = vpop.f32.mrf.mxu0
        %v939 = vadd.f32 %v827, %v938
        %940 = vmatmul.bf16.gmra.mxu0 %v821
        %v941 = vpop.f32.mrf.mxu0
        %v942 = vadd.f32 %v827, %v941
        %v943 = vpop.f32.mrf.mxu0
        %v944 = vadd.f32 %v827, %v943
        %945 = vmatmul.bf16.gmra.mxu0 %v822
        %v946 = vpop.f32.mrf.mxu0
        %v947 = vadd.f32 %v827, %v946
        %v948 = vpop.f32.mrf.mxu0
        %v949 = vadd.f32 %v827, %v948
        %950 = vmatmul.bf16.gmra.mxu0 %v823
        %v951 = vpop.f32.mrf.mxu0
        %v952 = vadd.f32 %v827, %v951
        %v953 = vpop.f32.mrf.mxu0
        %v954 = vadd.f32 %v827, %v953
        %955 = vmatmul.bf16.gmra.mxu0 %v824
        %v956 = vpop.f32.mrf.mxu0
        %v957 = vadd.f32 %v827, %v956
        %v958 = vpop.f32.mrf.mxu0
        %v959 = vadd.f32 %v827, %v958
        %960 = vmatmul.bf16.gmra.mxu0 %v825
        %v961 = vpop.f32.mrf.mxu0
        %v962 = vadd.f32 %v827, %v961
        %v963 = vpop.f32.mrf.mxu0
        %v964 = vadd.f32 %v827, %v963
        %965 = vdwg.mxu0
        %966 = vst [vmem:[%s348] sm:$0xff] %v887
        %967 = vst [vmem:[%s348 + $0x8] sm:$0xff] %v889
        %968 = vst [vmem:[%s348 + $0x10] sm:$0xff] %v892
        %969 = vst [vmem:[%s348 + $0x18] sm:$0xff] %v894
        %970 = vst [vmem:[%s348 + $0x20] sm:$0xff] %v897
        %971 = vst [vmem:[%s348 + $0x28] sm:$0xff] %v899
        %972 = vst [vmem:[%s348 + $0x30] sm:$0xff] %v902
        %973 = vst [vmem:[%s348 + $0x38] sm:$0xff] %v904
        %974 = vst [vmem:[%s348 + $0x40] sm:$0xff] %v907
        %975 = vst [vmem:[%s348 + $0x48] sm:$0xff] %v909
        %976 = vst [vmem:[%s348 + $0x50] sm:$0xff] %v912
        %977 = vst [vmem:[%s348 + $0x58] sm:$0xff] %v914
        %978 = vst [vmem:[%s348 + $0x60] sm:$0xff] %v917
        %979 = vst [vmem:[%s348 + $0x68] sm:$0xff] %v919
        %980 = vst [vmem:[%s348 + $0x70] sm:$0xff] %v922
        %981 = vst [vmem:[%s348 + $0x78] sm:$0xff] %v924
        %982 = vst [vmem:[%s348 + $0x80] sm:$0xff] %v927
        %983 = vst [vmem:[%s348 + $0x88] sm:$0xff] %v929
        %984 = vst [vmem:[%s348 + $0x90] sm:$0xff] %v932
        %985 = vst [vmem:[%s348 + $0x98] sm:$0xff] %v934
        %986 = vst [vmem:[%s348 + $0xa0] sm:$0xff] %v937
        %987 = vst [vmem:[%s348 + $0xa8] sm:$0xff] %v939
        %988 = vst [vmem:[%s348 + $0xb0] sm:$0xff] %v942
        %989 = vst [vmem:[%s348 + $0xb8] sm:$0xff] %v944
        %990 = vst [vmem:[%s348 + $0xc0] sm:$0xff] %v947
        %991 = vst [vmem:[%s348 + $0xc8] sm:$0xff] %v949
        %992 = vst [vmem:[%s348 + $0xd0] sm:$0xff] %v952
        %993 = vst [vmem:[%s348 + $0xd8] sm:$0xff] %v954
        %994 = vst [vmem:[%s348 + $0xe0] sm:$0xff] %v957
        %995 = vst [vmem:[%s348 + $0xe8] sm:$0xff] %v959
        %996 = vst [vmem:[%s348 + $0xf0] sm:$0xff] %v962
        %997 = vst [vmem:[%s348 + $0xf8] sm:$0xff] %v964
        %s998 = sand.u32 %s186, 1
        %s999 = scalar_lea.sflag [#allocation4], %s998
        %s1000 = sand.u32 %s186, 1
        %s1001 = smul.addr %s1000, 256
        %s1002 = scalar_lea.vmem [#allocation10], %s1001
        // Predicated region
        $region65: #{tpu_custom_call.1} parent=47 // pred_check
          %p1003 = pneg %p196
        $region66: #{tpu_custom_call.1} parent=47 // pred_check_branch
          %1005 = sbr.rel (%p1003) target = $region68
        $region67: #{tpu_custom_call.1} parent=47 // pred_region
          %s1006 = smul.u32 32, %s26
          %1008 = vsyncadd %s999, 0
          %s1009 = smul.addr %s1006, 8
          %s1010 = scalar_lea.hbm %s7, %s1009
          %s1011 = sshll.u32 %s1002, 4
          %s1012 = int_to_ptr.vmem [resolvable:$true] %s1011
          %s1013 = sshll.u32 %s1010, 4
          %s1014 = int_to_ptr.hbm [resolvable:$true] %s1013
          %1019 = dma.vmem_to_hbm [thread:$0]  %s1012, 4096, %s1014, %s999, 128, 128, 8
        $region68: #{tpu_custom_call.1} parent=47 // pred_fallthru
          _
      $region48: #{tpu_custom_call.1} parent=5 // pred_fallthru
        _
      %p1020 = scmp.le.s32.totalorder 2, %s21
      // Predicated region
      $region69: #{tpu_custom_call.1} parent=5 // pred_check
        %p1021 = pneg %p1020
      $region70: #{tpu_custom_call.1} parent=5 // pred_check_branch
        %1023 = sbr.rel (%p1021) target = $region72
      $region71: #{tpu_custom_call.1} parent=5 // pred_region
        %s1024 = ssub.s32 %s21, 2
        // Predicated region
        $region73: #{tpu_custom_call.1} parent=71 // pred_check
          %p1025 = pneg %p202
        $region74: #{tpu_custom_call.1} parent=71 // pred_check_branch
          %1027 = sbr.rel (%p1025) target = $region76
        $region75: #{tpu_custom_call.1} parent=71 // pred_region
          %s1028 = sand.u32 %s187, 1
          %s1029 = scalar_lea.sflag [#allocation4], %s1028
          %s1030 = sand.u32 %s187, 1
          %s1031 = smul.addr %s1030, 256
          %s1032 = scalar_lea.vmem [#allocation10], %s1031
          %1034 = dma.done %s1029, 4096
        $region76: #{tpu_custom_call.1} parent=71 // pred_fallthru
          _
      $region72: #{tpu_custom_call.1} parent=5 // pred_fallthru
        _
    $region6: #{tpu_custom_call.1} parent=1 // loop_footer
      %s25 = sadd.s32 1, %s21
    $region7: #{tpu_custom_call.1} parent=1 // loop_footer_branch
      %20 = sbr.rel target = $region3
    $region8: #{tpu_custom_call.1} parent=1 // loop_exit
      _
    %1035 = vsyncpa [#allocation3], 1
    %s1036 = scalar_lea.sflag [#allocation3], 1
    %1037 = vsyncpa %s1036, 1
    %1038 = vsyncpa [#allocation6], 1
    %1039 = vsyncpa [#allocation9], 1
    %1040 = vsyncpa [#allocation4], 1
    %s1041 = scalar_lea.sflag [#allocation4], 1
    %1042 = vsyncpa %s1041, 1

</llo_original>
